<compile_context>
chip_gen: v6e
topology: v6e:2x2x1
jax: 0.10.0
libtpu: 0.0.40
codegen_flags: <defaults>
</compile_context>

<pallas_src>
import jax
import jax.numpy as jnp
from jax.experimental import pallas as pl
from jax.experimental.pallas import tpu as pltpu


def _pick_row_tile(n):
    """Row-tile size over nodes: full N for small graphs, else a /8 divisor."""
    if n <= 256:
        return n
    for t in (512, 256, 128, 64, 32, 16, 8):
        if n % t == 0:
            return t
    return n


def _rgcn_kernel(x_ref, adj_ref, we_ref, be_ref, ws_ref, bs_ref, out_ref, h_ref):
    # x_ref:   (N, Din)      bf16   full node features for this batch element
    # adj_ref: (TN, E*N)     bf16   row tile of the flattened adjacency
    # we_ref:  (E, Din, Dp)  bf16   all edge-type weights (loaded once)
    # be_ref:  (E, 1, Dp)    f32
    # ws_ref:  (Din, Dp)     bf16
    # bs_ref:  (1, Dp)       f32
    # out_ref: (TN, Dp)      f32/out dtype
    # h_ref:   (E*N, Dp)     bf16   stacked transformed-feature slab (scratch)
    n_nodes = x_ref.shape[0]
    n_edge = we_ref.shape[0]
    tn = out_ref.shape[0]

    # Phase 1: per-edge-type feature transform into the stacked slab,
    # computed once per batch element (row tile r == 0).  The scratch slab
    # persists across the (arbitrary) row-tile grid axis.
    @pl.when(pl.program_id(1) == 0)
    def _():
        x = x_ref[...]
        for e in range(n_edge):
            h = jnp.dot(x, we_ref[e], preferred_element_type=jnp.float32) + be_ref[e]
            h_ref[pl.ds(e * n_nodes, n_nodes), :] = h.astype(h_ref.dtype)

    # Phase 2: single fused aggregation matmul over the combined (edge, node)
    # contraction axis:  (TN, E*N) @ (E*N, Dp)  ==  sum_e adj_e @ (x @ W_e + b_e)
    agg = jnp.dot(adj_ref[...], h_ref[...], preferred_element_type=jnp.float32)

    # Self-loop linear for this row tile of nodes.
    r0 = pl.multiple_of(pl.program_id(1) * tn, tn)
    x_tile = x_ref[pl.ds(r0, tn), :]
    self_h = jnp.dot(x_tile, ws_ref[...], preferred_element_type=jnp.float32) + bs_ref[...]

    # Activation (tanh). Dropout with rate 0.0 is identity.
    out_ref[...] = jnp.tanh(agg + self_h).astype(out_ref.dtype)


def graph_conv_layer(n_tensor, adj_tensor, w_edge, b_edge, w_self, b_self,
                     h_tensor=None):
    """Pallas implementation of GraphConvolutionLayer.forward (tanh activation)."""
    if h_tensor is not None:
        x = jnp.concatenate((n_tensor, h_tensor), axis=-1)
    else:
        x = n_tensor

    out_dtype = x.dtype
    B, N, Din = x.shape
    E = adj_tensor.shape[1]
    Dout = w_self.shape[-1]

    # Lane-dense output: pad Dout up to a multiple of 128 with zero columns.
    Dp = ((Dout + 127) // 128) * 128
    pad = Dp - Dout
    b_edge = b_edge.reshape(E, Dout)
    b_self = b_self.reshape(Dout)
    if pad:
        w_edge = jnp.pad(w_edge, ((0, 0), (0, 0), (0, pad)))
        b_edge = jnp.pad(b_edge, ((0, 0), (0, pad)))
        w_self = jnp.pad(w_self, ((0, 0), (0, pad)))
        b_self = jnp.pad(b_self, (0, pad))
    b_edge = b_edge.reshape(E, 1, Dp).astype(jnp.float32)
    b_self = b_self.reshape(1, Dp).astype(jnp.float32)

    # bf16 MXU operands (f32 accumulation inside the kernel).
    x_bf = x.astype(jnp.bfloat16)
    w_edge_bf = w_edge.astype(jnp.bfloat16)
    w_self_bf = w_self.astype(jnp.bfloat16)

    # Flatten adjacency to (B, N, E*N) with columns ordered edge-type-major,
    # node-minor, matching the stacked feature slab.  XLA fuses the bf16 cast
    # with this transpose+reshape into a single copy pass.
    adj_flat = (adj_tensor.astype(jnp.bfloat16)
                .transpose(0, 2, 1, 3)
                .reshape(B, N, E * N))

    TN = _pick_row_tile(N)
    grid = (B, N // TN)

    out_padded = pl.pallas_call(
        _rgcn_kernel,
        out_shape=jax.ShapeDtypeStruct((B, N, Dp), out_dtype),
        grid_spec=pltpu.PrefetchScalarGridSpec(
            num_scalar_prefetch=0,
            grid=grid,
            in_specs=[
                pl.BlockSpec((pl.Squeezed(), N, Din), lambda b, r: (b, 0, 0)),      # x
                pl.BlockSpec((pl.Squeezed(), TN, E * N), lambda b, r: (b, r, 0)),   # adj_flat
                pl.BlockSpec((E, Din, Dp), lambda b, r: (0, 0, 0)),                 # all W_e
                pl.BlockSpec((E, 1, Dp), lambda b, r: (0, 0, 0)),                   # all b_e
                pl.BlockSpec((Din, Dp), lambda b, r: (0, 0)),                       # W_self
                pl.BlockSpec((1, Dp), lambda b, r: (0, 0)),                         # b_self
            ],
            out_specs=pl.BlockSpec((pl.Squeezed(), TN, Dp), lambda b, r: (b, r, 0)),
            scratch_shapes=[pltpu.VMEM((E * N, Dp), jnp.bfloat16)],
        ),
        compiler_params=pltpu.CompilerParams(
            # h slab is reused across row tiles within a batch element, so the
            # row-tile axis must stay on one core -> "arbitrary"; megacore
            # parallelism comes from the batch axis.
            dimension_semantics=("parallel", "arbitrary"),
            vmem_limit_bytes=48 * 1024 * 1024,
        ),
    )(x_bf, adj_flat, w_edge_bf, b_edge, w_self_bf, b_self)

    return out_padded[..., :Dout] if pad else out_padded


def _reference(x, adj, w_edge, b_edge, w_self, b_self):
    # Pure-JAX f32 reference matching the PyTorch forward.
    per_edge = jnp.einsum("bnd,edf->benf", x, w_edge) + b_edge[:, None, :]
    agg = jnp.einsum("benm,bemf->benf", adj, per_edge)
    out_sum = jnp.sum(agg, axis=1)
    self_part = x @ w_self + b_self
    return jnp.tanh(out_sum + self_part)


if __name__ == "__main__":
    B, N, Din, Dout, E = 2, 8, 16, 32, 3

    key = jax.random.PRNGKey(0)
    k = jax.random.split(key, 7)

    n_tensor = jax.random.normal(k[0], (B, N, Din), dtype=jnp.float32)
    adj_tensor = jax.random.uniform(k[1], (B, E, N, N), dtype=jnp.float32)

    # Deterministic parameter init (Linear-like scaling).
    scale_e = 1.0 / jnp.sqrt(Din)
    w_edge = jax.random.uniform(k[2], (E, Din, Dout), jnp.float32, -scale_e, scale_e)
    b_edge = jax.random.uniform(k[3], (E, Dout), jnp.float32, -scale_e, scale_e)
    w_self = jax.random.uniform(k[4], (Din, Dout), jnp.float32, -scale_e, scale_e)
    b_self = jax.random.uniform(k[5], (Dout,), jnp.float32, -scale_e, scale_e)

    out = graph_conv_layer(n_tensor, adj_tensor, w_edge, b_edge, w_self, b_self)
    out = jax.block_until_ready(out)

    ref = _reference(n_tensor, adj_tensor, w_edge, b_edge, w_self, b_self)
    assert out.shape == (B, N, Dout)
    # bf16 MXU operands -> relaxed tolerance vs. the f32 reference.
    assert jnp.allclose(out, ref, atol=2e-2, rtol=2e-2)

    # TODO(synk): dropout with rate > 0 (training mode) not implemented; rate=0.0 is identity.
    print("KERNEL_OK")
</pallas_src>

<mosaic_0001>
module attributes {stable_mosaic.version = 11 : i64} {
  func.func @_rgcn_kernel(%arg0: i32, %arg1: i32, %arg2: memref<1x8x16xbf16, #tpu.memory_space<vmem>>, %arg3: memref<1x8x24xbf16, #tpu.memory_space<vmem>>, %arg4: memref<3x16x128xbf16, #tpu.memory_space<vmem>>, %arg5: memref<3x1x128xf32, #tpu.memory_space<vmem>>, %arg6: memref<16x128xbf16, #tpu.memory_space<vmem>>, %arg7: memref<1x128xf32, #tpu.memory_space<vmem>>, %arg8: memref<1x8x128xf32, #tpu.memory_space<vmem>>, %arg9: memref<24x128xbf16, #tpu.memory_space<vmem>>) attributes {dimension_semantics = [#tpu.dimension_semantics<parallel>, #tpu.dimension_semantics<arbitrary>], iteration_bounds = array<i64: 2, 1>, scalar_prefetch = 0 : i64, scratch_operands = 1 : i64, tpu.core_type = #tpu.core_type<tc>, window_params = [{transform_indices = @transform_0, window_bounds = array<i64: 1, 8, 16>}, {transform_indices = @transform_1, window_bounds = array<i64: 1, 8, 24>}, {pipeline_mode = #tpu.pipeline_mode<synchronous>, transform_indices = @transform_2, window_bounds = array<i64: 3, 16, 128>}, {pipeline_mode = #tpu.pipeline_mode<synchronous>, transform_indices = @transform_3, window_bounds = array<i64: 3, 1, 128>}, {pipeline_mode = #tpu.pipeline_mode<synchronous>, transform_indices = @transform_4, window_bounds = array<i64: 16, 128>}, {pipeline_mode = #tpu.pipeline_mode<synchronous>, transform_indices = @transform_5, window_bounds = array<i64: 1, 128>}, {transform_indices = @transform_6, window_bounds = array<i64: 1, 8, 128>}]} {
    %c0_i32 = arith.constant 0 : i32
    %0 = arith.cmpi eq, %arg1, %c0_i32 : i32
    %1 = arith.extui %0 : i1 to i32
    %c0_i32_0 = arith.constant 0 : i32
    %2 = arith.cmpi ne, %1, %c0_i32_0 : i32
    scf.if %2 {
      %c0_15 = arith.constant 0 : index
      %c0_16 = arith.constant 0 : index
      %c0_17 = arith.constant 0 : index
      %22 = vector.load %arg2[%c0_15, %c0_16, %c0_17] : memref<1x8x16xbf16, #tpu.memory_space<vmem>>, vector<1x8x16xbf16>
      %23 = vector.shape_cast %22 : vector<1x8x16xbf16> to vector<8x16xbf16>
      %c0_18 = arith.constant 0 : index
      %c0_19 = arith.constant 0 : index
      %c0_20 = arith.constant 0 : index
      %24 = vector.load %arg4[%c0_18, %c0_19, %c0_20] : memref<3x16x128xbf16, #tpu.memory_space<vmem>>, vector<1x16x128xbf16>
      %25 = vector.shape_cast %24 : vector<1x16x128xbf16> to vector<16x128xbf16>
      %cst_21 = arith.constant dense<0.000000e+00> : vector<8x128xf32>
      %26 = tpu.matmul %23, %25, %cst_21 {dimension_numbers = #tpu.dot_dimension_numbers<[1], [0], [0], [1], [0, 0, 1, 1], [], []>} : vector<8x16xbf16>, vector<16x128xbf16>, vector<8x128xf32> -> vector<8x128xf32>
      %c0_22 = arith.constant 0 : index
      %c0_23 = arith.constant 0 : index
      %c0_24 = arith.constant 0 : index
      %27 = vector.load %arg5[%c0_22, %c0_23, %c0_24] : memref<3x1x128xf32, #tpu.memory_space<vmem>>, vector<1x1x128xf32>
      %28 = vector.shape_cast %27 : vector<1x1x128xf32> to vector<1x128xf32>
      %29 = vector.broadcast %28 : vector<1x128xf32> to vector<8x128xf32>
      %30 = arith.addf %26, %29 : vector<8x128xf32>
      %31 = arith.truncf %30 : vector<8x128xf32> to vector<8x128xbf16>
      %c0_25 = arith.constant 0 : index
      %c0_26 = arith.constant 0 : index
      %32 = vector.load %arg9[%c0_25, %c0_26] : memref<24x128xbf16, #tpu.memory_space<vmem>>, vector<8x128xbf16>
      tpu.vector_store %arg9[%c0_25, %c0_26], %31 {strides = array<i32>} : memref<24x128xbf16, #tpu.memory_space<vmem>>, vector<8x128xbf16>,
      %c1 = arith.constant 1 : index
      %c0_27 = arith.constant 0 : index
      %c0_28 = arith.constant 0 : index
      %33 = vector.load %arg4[%c1, %c0_27, %c0_28] : memref<3x16x128xbf16, #tpu.memory_space<vmem>>, vector<1x16x128xbf16>
      %34 = vector.shape_cast %33 : vector<1x16x128xbf16> to vector<16x128xbf16>
      %cst_29 = arith.constant dense<0.000000e+00> : vector<8x128xf32>
      %35 = tpu.matmul %23, %34, %cst_29 {dimension_numbers = #tpu.dot_dimension_numbers<[1], [0], [0], [1], [0, 0, 1, 1], [], []>} : vector<8x16xbf16>, vector<16x128xbf16>, vector<8x128xf32> -> vector<8x128xf32>
      %c1_30 = arith.constant 1 : index
      %c0_31 = arith.constant 0 : index
      %c0_32 = arith.constant 0 : index
      %36 = vector.load %arg5[%c1_30, %c0_31, %c0_32] : memref<3x1x128xf32, #tpu.memory_space<vmem>>, vector<1x1x128xf32>
      %37 = vector.shape_cast %36 : vector<1x1x128xf32> to vector<1x128xf32>
      %38 = vector.broadcast %37 : vector<1x128xf32> to vector<8x128xf32>
      %39 = arith.addf %35, %38 : vector<8x128xf32>
      %40 = arith.truncf %39 : vector<8x128xf32> to vector<8x128xbf16>
      %c8 = arith.constant 8 : index
      %c0_33 = arith.constant 0 : index
      %41 = vector.load %arg9[%c8, %c0_33] : memref<24x128xbf16, #tpu.memory_space<vmem>>, vector<8x128xbf16>
      tpu.vector_store %arg9[%c8, %c0_33], %40 {strides = array<i32>} : memref<24x128xbf16, #tpu.memory_space<vmem>>, vector<8x128xbf16>,
      %c2 = arith.constant 2 : index
      %c0_34 = arith.constant 0 : index
      %c0_35 = arith.constant 0 : index
      %42 = vector.load %arg4[%c2, %c0_34, %c0_35] : memref<3x16x128xbf16, #tpu.memory_space<vmem>>, vector<1x16x128xbf16>
      %43 = vector.shape_cast %42 : vector<1x16x128xbf16> to vector<16x128xbf16>
      %cst_36 = arith.constant dense<0.000000e+00> : vector<8x128xf32>
      %44 = tpu.matmul %23, %43, %cst_36 {dimension_numbers = #tpu.dot_dimension_numbers<[1], [0], [0], [1], [0, 0, 1, 1], [], []>} : vector<8x16xbf16>, vector<16x128xbf16>, vector<8x128xf32> -> vector<8x128xf32>
      %c2_37 = arith.constant 2 : index
      %c0_38 = arith.constant 0 : index
      %c0_39 = arith.constant 0 : index
      %45 = vector.load %arg5[%c2_37, %c0_38, %c0_39] : memref<3x1x128xf32, #tpu.memory_space<vmem>>, vector<1x1x128xf32>
      %46 = vector.shape_cast %45 : vector<1x1x128xf32> to vector<1x128xf32>
      %47 = vector.broadcast %46 : vector<1x128xf32> to vector<8x128xf32>
      %48 = arith.addf %44, %47 : vector<8x128xf32>
      %49 = arith.truncf %48 : vector<8x128xf32> to vector<8x128xbf16>
      %c16 = arith.constant 16 : index
      %c0_40 = arith.constant 0 : index
      %50 = vector.load %arg9[%c16, %c0_40] : memref<24x128xbf16, #tpu.memory_space<vmem>>, vector<8x128xbf16>
      tpu.vector_store %arg9[%c16, %c0_40], %49 {strides = array<i32>} : memref<24x128xbf16, #tpu.memory_space<vmem>>, vector<8x128xbf16>,
    } else {
    }
    %c0 = arith.constant 0 : index
    %c0_1 = arith.constant 0 : index
    %c0_2 = arith.constant 0 : index
    %3 = vector.load %arg3[%c0, %c0_1, %c0_2] : memref<1x8x24xbf16, #tpu.memory_space<vmem>>, vector<1x8x24xbf16>
    %4 = vector.shape_cast %3 : vector<1x8x24xbf16> to vector<8x24xbf16>
    %c0_3 = arith.constant 0 : index
    %c0_4 = arith.constant 0 : index
    %5 = vector.load %arg9[%c0_3, %c0_4] : memref<24x128xbf16, #tpu.memory_space<vmem>>, vector<24x128xbf16>
    %cst = arith.constant dense<0.000000e+00> : vector<8x128xf32>
    %6 = tpu.matmul %4, %5, %cst {dimension_numbers = #tpu.dot_dimension_numbers<[1], [0], [0], [1], [0, 0, 1, 1], [], []>} : vector<8x24xbf16>, vector<24x128xbf16>, vector<8x128xf32> -> vector<8x128xf32>
    %c8_i32 = arith.constant 8 : i32
    %7 = arith.muli %arg1, %c8_i32 : i32
    %8 = tpu.assume_multiple %7, 8 : i32
    %c0_5 = arith.constant 0 : index
    %9 = arith.index_cast %8 : i32 to index
    %c0_6 = arith.constant 0 : index
    %10 = vector.load %arg2[%c0_5, %9, %c0_6] : memref<1x8x16xbf16, #tpu.memory_space<vmem>>, vector<1x8x16xbf16>
    %11 = vector.shape_cast %10 : vector<1x8x16xbf16> to vector<8x16xbf16>
    %c0_7 = arith.constant 0 : index
    %c0_8 = arith.constant 0 : index
    %12 = vector.load %arg6[%c0_7, %c0_8] : memref<16x128xbf16, #tpu.memory_space<vmem>>, vector<16x128xbf16>
    %cst_9 = arith.constant dense<0.000000e+00> : vector<8x128xf32>
    %13 = tpu.matmul %11, %12, %cst_9 {dimension_numbers = #tpu.dot_dimension_numbers<[1], [0], [0], [1], [0, 0, 1, 1], [], []>} : vector<8x16xbf16>, vector<16x128xbf16>, vector<8x128xf32> -> vector<8x128xf32>
    %c0_10 = arith.constant 0 : index
    %c0_11 = arith.constant 0 : index
    %14 = vector.load %arg7[%c0_10, %c0_11] : memref<1x128xf32, #tpu.memory_space<vmem>>, vector<1x128xf32>
    %15 = vector.broadcast %14 : vector<1x128xf32> to vector<8x128xf32>
    %16 = arith.addf %13, %15 : vector<8x128xf32>
    %17 = arith.addf %6, %16 : vector<8x128xf32>
    %18 = math.tanh %17 : vector<8x128xf32>
    %c0_12 = arith.constant 0 : index
    %c0_13 = arith.constant 0 : index
    %c0_14 = arith.constant 0 : index
    %19 = vector.load %arg8[%c0_12, %c0_13, %c0_14] : memref<1x8x128xf32, #tpu.memory_space<vmem>>, vector<1x8x128xf32>
    %20 = vector.shape_cast %19 : vector<1x8x128xf32> to vector<8x128xf32>
    %21 = vector.shape_cast %18 : vector<8x128xf32> to vector<1x8x128xf32>
    tpu.vector_store %arg8[%c0_12, %c0_13, %c0_14], %21 {strides = array<i32>} : memref<1x8x128xf32, #tpu.memory_space<vmem>>, vector<1x8x128xf32>,
    return
  }
  func.func @transform_0(%arg0: i32, %arg1: i32) -> (i32, i32, i32) {
    %c0_i32 = arith.constant 0 : i32
    %c0_i32_0 = arith.constant 0 : i32
    %c0_i32_1 = arith.constant 0 : i32
    return %arg0, %c0_i32, %c0_i32_0 : i32, i32, i32
  }
  func.func @transform_1(%arg0: i32, %arg1: i32) -> (i32, i32, i32) {
    %c0_i32 = arith.constant 0 : i32
    %c0_i32_0 = arith.constant 0 : i32
    return %arg0, %arg1, %c0_i32 : i32, i32, i32
  }
  func.func @transform_2(%arg0: i32, %arg1: i32) -> (i32, i32, i32) {
    %c0_i32 = arith.constant 0 : i32
    %c0_i32_0 = arith.constant 0 : i32
    %c0_i32_1 = arith.constant 0 : i32
    %c0_i32_2 = arith.constant 0 : i32
    return %c0_i32, %c0_i32_0, %c0_i32_1 : i32, i32, i32
  }
  func.func @transform_3(%arg0: i32, %arg1: i32) -> (i32, i32, i32) {
    %c0_i32 = arith.constant 0 : i32
    %c0_i32_0 = arith.constant 0 : i32
    %c0_i32_1 = arith.constant 0 : i32
    %c0_i32_2 = arith.constant 0 : i32
    return %c0_i32, %c0_i32_0, %c0_i32_1 : i32, i32, i32
  }
  func.func @transform_4(%arg0: i32, %arg1: i32) -> (i32, i32) {
    %c0_i32 = arith.constant 0 : i32
    %c0_i32_0 = arith.constant 0 : i32
    %c0_i32_1 = arith.constant 0 : i32
    return %c0_i32, %c0_i32_0 : i32, i32
  }
  func.func @transform_5(%arg0: i32, %arg1: i32) -> (i32, i32) {
    %c0_i32 = arith.constant 0 : i32
    %c0_i32_0 = arith.constant 0 : i32
    %c0_i32_1 = arith.constant 0 : i32
    return %c0_i32, %c0_i32_0 : i32, i32
  }
  func.func @transform_6(%arg0: i32, %arg1: i32) -> (i32, i32, i32) {
    %c0_i32 = arith.constant 0 : i32
    %c0_i32_0 = arith.constant 0 : i32
    return %arg0, %arg1, %c0_i32 : i32, i32, i32
  }
}

</mosaic_0001>

<llo_original>
// kernel: tpu_custom_call.1
$region0: #{tpu_custom_call.1}
  #allocation0 [shape = 'u32[]', space=smem, size = 0x4, offset = 0x4, fixed_abs, tag = 'smem constant byte address 0x4 - core index']
  #allocation1 [shape = 'u32[144,128]{1,0:T(1,128)}', space=vmem, size = 0x12000, scoped, tag = 'internal scratch']
  #allocation2 [shape = 'bf16[24,128]{1,0:T(8,128)(2,1)}', space=vmem, size = 0x1800, scoped, tag = 'scratch operand']
  %s0 = inlined_call_operand.hbm [shape: bf16[2,8,16], index: 0, kind: input, shape index: {}]
  %s1 = inlined_call_operand.hbm [shape: bf16[2,8,24], index: 1, kind: input, shape index: {}]
  %s2 = inlined_call_operand.hbm [shape: bf16[3,16,128], index: 2, kind: input, shape index: {}]
  %s3 = inlined_call_operand.vmem [shape: f32[3,1,128], index: 3, kind: input, shape index: {}]
  %s4 = inlined_call_operand.hbm [shape: bf16[16,128], index: 4, kind: input, shape index: {}]
  %s5 = inlined_call_operand.vmem [shape: f32[1,128], index: 5, kind: input, shape index: {}]
  %s6 = inlined_call_operand.hbm [shape: f32[2,8,128], index: 6, kind: output, shape index: {}]
  %s7 = sld [smem:[#allocation0]]
  $region77: #{tpu_custom_call.1} parent=0
    _
  %s9 = ssub.s32 1, %s7
  %s10 = scalar_select 0, %s9, %s7
  $region1: #{tpu_custom_call.1} parent=0
    #allocation3 [shape = 'u8[4096]{0}', space=vmem, size = 0x1000, scoped, tag = 'input window, operand 0']
    #allocation4 [shape = 's32[2]{0}', space=sflag, size = 0x8, scoped, tag = 'scoped memory for tpu_custom_call.1']
    #allocation5 [shape = 's32[2]{0}', space=sflag, size = 0x8, scoped, tag = 'scoped memory for tpu_custom_call.1']
    #allocation6 [shape = 'u8[4096]{0}', space=vmem, size = 0x1000, scoped, tag = 'input window, operand 1']
    #allocation7 [shape = 's32[2]{0}', space=sflag, size = 0x8, scoped, tag = 'scoped memory for tpu_custom_call.1']
    #allocation8 [shape = 'u8[12288]{0}', space=vmem, size = 0x3000, scoped, tag = 'input window, operand 2, single buffered']
    #allocation9 [shape = 'u8[4096]{0}', space=vmem, size = 0x1000, scoped, tag = 'input window, operand 4, single buffered']
    #allocation10 [shape = 's32[1]{0}', space=sflag, size = 0x4, scoped, tag = 'scoped memory for tpu_custom_call.1']
    #allocation11 [shape = 'u8[8192]{0}', space=vmem, size = 0x2000, scoped, tag = 'output window, operand 0']
    %11 = vsyncpa [#allocation4], 0
    %s12 = scalar_lea.sflag [#allocation4], 1
    %13 = vsyncpa %s12, 0
    %14 = vsyncpa [#allocation7], 0
    %s15 = scalar_lea.sflag [#allocation7], 1
    %16 = vsyncpa %s15, 0
    %17 = vsyncpa [#allocation10], 0
    %18 = vsyncpa [#allocation5], 0
    %s19 = scalar_lea.sflag [#allocation5], 1
    %20 = vsyncpa %s19, 0
    loop: start=0, step=1, limit=4
    $region2: #{tpu_custom_call.1} parent=1 // loop_pre_header
      _
    $region3: #{tpu_custom_call.1} parent=1 // loop_header
      %s22 = sphi 0, %s26
      %p23 = scmp.ge.s32.totalorder %s22, 4
      %s29 = sphi 0, %s41
      %s30 = sphi 0, %s37
      %s31 = sphi 0, %s29
      %s32 = sphi 0, %s30
      %s33 = sphi 0, %s31
      %s34 = sphi 0, %s32
      %s44 = sphi 0, %s46
      %s47 = sphi 0, %s44
      %s48 = sphi 0, %s47
      %s64 = sphi 0, %s48
      %s72 = sphi 0, %s74
      %s75 = sphi 0, %s72
      %s76 = sphi 0, %s75
      %s92 = sphi 0, %s76
      %s96 = sphi 0, %s96
      %s98 = sphi 0, %s96
      %s99 = sphi 0, %s98
      %s113 = sphi 0, %s99
      %s117 = sphi 0, %s117
      %s119 = sphi 0, %s117
      %s120 = sphi 0, %s119
      %s134 = sphi 0, %s120
      %s138 = sphi 0, %s138
      %s140 = sphi 0, %s138
      %s141 = sphi 0, %s140
      %s155 = sphi 0, %s141
      %s159 = sphi 0, %s159
      %s161 = sphi 0, %s159
      %s162 = sphi 0, %s161
      %s176 = sphi 0, %s162
      %s184 = sphi 0, %s186
      %s187 = sphi 0, %s184
      %s188 = sphi 0, %s187
      %s204 = sphi 0, %s188
    $region4: #{tpu_custom_call.1} parent=1 // loop_header_branch
      %25 = sbr.rel (%p23) target = $region8
    $region5: #{tpu_custom_call.1} parent=1 // loop_body
      %s27 = ssub.s32 %s22, 1
      %s28 = ssub.s32 %s22, 2
      %s35 = sadd.s32 1, %s30
      %p36 = scmp.ge.s32.totalorder %s35, 1
      %s37 = scalar_select %p36, 0, %s35
      %s38 = sadd.s32 1, %s29
      %s39 = scalar_select %p36, %s38, %s29
      %p40 = scmp.ge.s32.totalorder %s39, 2
      %s41 = scalar_select %p40, 0, %s39
      %s42 = ssub.s32 %s29, %s41
      %p43 = scmp.eq.s32.totalorder %s42, 0
      %s45 = sadd.s32 %s44, 1
      %s46 = scalar_select %p43, %s44, %s45
      %p49 = pneg %p43
      %p50 = scmp.eq.s32.totalorder %s22, 1
      %p51 = por %p49, %p50
      %p52 = scmp.ne.s32.totalorder %s44, %s47
      %p53 = scmp.eq.s32.totalorder %s22, 0
      %p54 = por %p52, %p53
      %p55 = scmp.ne.s32.totalorder %s44, %s47
      %p56 = scmp.eq.s32.totalorder %s27, 1
      %p57 = por %p55, %p56
      %p58 = scmp.ne.s32.totalorder %s47, %s48
      %p59 = scmp.eq.s32.totalorder %s27, 0
      %p60 = por %p58, %p59
      %p61 = scmp.ne.s32.totalorder %s47, %s48
      %p62 = scmp.eq.s32.totalorder %s28, 1
      %p63 = por %p61, %p62
      %p65 = scmp.ne.s32.totalorder %s48, %s64
      %p66 = scmp.eq.s32.totalorder %s28, 0
      %p67 = por %p65, %p66
      %s68 = ssub.s32 %s29, %s41
      %s69 = ssub.s32 %s30, %s37
      %s70 = sor.u32 %s68, %s69
      %p71 = scmp.eq.s32.totalorder %s70, 0
      %s73 = sadd.s32 %s72, 1
      %s74 = scalar_select %p71, %s72, %s73
      %p77 = pneg %p71
      %p78 = scmp.eq.s32.totalorder %s22, 1
      %p79 = por %p77, %p78
      %p80 = scmp.ne.s32.totalorder %s72, %s75
      %p81 = scmp.eq.s32.totalorder %s22, 0
      %p82 = por %p80, %p81
      %p83 = scmp.ne.s32.totalorder %s72, %s75
      %p84 = scmp.eq.s32.totalorder %s27, 1
      %p85 = por %p83, %p84
      %p86 = scmp.ne.s32.totalorder %s75, %s76
      %p87 = scmp.eq.s32.totalorder %s27, 0
      %p88 = por %p86, %p87
      %p89 = scmp.ne.s32.totalorder %s75, %s76
      %p90 = scmp.eq.s32.totalorder %s28, 1
      %p91 = por %p89, %p90
      %p93 = scmp.ne.s32.totalorder %s76, %s92
      %p94 = scmp.eq.s32.totalorder %s28, 0
      %p95 = por %p93, %p94
      %s97 = sadd.s32 %s96, 1
      %p100 = scmp.eq.s32.totalorder %s22, 1
      %p101 = scmp.ne.s32.totalorder %s96, %s98
      %p102 = scmp.eq.s32.totalorder %s22, 0
      %p103 = por %p101, %p102
      %p104 = scmp.ne.s32.totalorder %s96, %s98
      %p105 = scmp.eq.s32.totalorder %s27, 1
      %p106 = por %p104, %p105
      %p107 = scmp.ne.s32.totalorder %s98, %s99
      %p108 = scmp.eq.s32.totalorder %s27, 0
      %p109 = por %p107, %p108
      %p110 = scmp.ne.s32.totalorder %s98, %s99
      %p111 = scmp.eq.s32.totalorder %s28, 1
      %p112 = por %p110, %p111
      %p114 = scmp.ne.s32.totalorder %s99, %s113
      %p115 = scmp.eq.s32.totalorder %s28, 0
      %p116 = por %p114, %p115
      %s118 = sadd.s32 %s117, 1
      %p121 = scmp.eq.s32.totalorder %s22, 1
      %p122 = scmp.ne.s32.totalorder %s117, %s119
      %p123 = scmp.eq.s32.totalorder %s22, 0
      %p124 = por %p122, %p123
      %p125 = scmp.ne.s32.totalorder %s117, %s119
      %p126 = scmp.eq.s32.totalorder %s27, 1
      %p127 = por %p125, %p126
      %p128 = scmp.ne.s32.totalorder %s119, %s120
      %p129 = scmp.eq.s32.totalorder %s27, 0
      %p130 = por %p128, %p129
      %p131 = scmp.ne.s32.totalorder %s119, %s120
      %p132 = scmp.eq.s32.totalorder %s28, 1
      %p133 = por %p131, %p132
      %p135 = scmp.ne.s32.totalorder %s120, %s134
      %p136 = scmp.eq.s32.totalorder %s28, 0
      %p137 = por %p135, %p136
      %s139 = sadd.s32 %s138, 1
      %p142 = scmp.eq.s32.totalorder %s22, 1
      %p143 = scmp.ne.s32.totalorder %s138, %s140
      %p144 = scmp.eq.s32.totalorder %s22, 0
      %p145 = por %p143, %p144
      %p146 = scmp.ne.s32.totalorder %s138, %s140
      %p147 = scmp.eq.s32.totalorder %s27, 1
      %p148 = por %p146, %p147
      %p149 = scmp.ne.s32.totalorder %s140, %s141
      %p150 = scmp.eq.s32.totalorder %s27, 0
      %p151 = por %p149, %p150
      %p152 = scmp.ne.s32.totalorder %s140, %s141
      %p153 = scmp.eq.s32.totalorder %s28, 1
      %p154 = por %p152, %p153
      %p156 = scmp.ne.s32.totalorder %s141, %s155
      %p157 = scmp.eq.s32.totalorder %s28, 0
      %p158 = por %p156, %p157
      %s160 = sadd.s32 %s159, 1
      %p163 = scmp.eq.s32.totalorder %s22, 1
      %p164 = scmp.ne.s32.totalorder %s159, %s161
      %p165 = scmp.eq.s32.totalorder %s22, 0
      %p166 = por %p164, %p165
      %p167 = scmp.ne.s32.totalorder %s159, %s161
      %p168 = scmp.eq.s32.totalorder %s27, 1
      %p169 = por %p167, %p168
      %p170 = scmp.ne.s32.totalorder %s161, %s162
      %p171 = scmp.eq.s32.totalorder %s27, 0
      %p172 = por %p170, %p171
      %p173 = scmp.ne.s32.totalorder %s161, %s162
      %p174 = scmp.eq.s32.totalorder %s28, 1
      %p175 = por %p173, %p174
      %p177 = scmp.ne.s32.totalorder %s162, %s176
      %p178 = scmp.eq.s32.totalorder %s28, 0
      %p179 = por %p177, %p178
      %s180 = ssub.s32 %s29, %s41
      %s181 = ssub.s32 %s30, %s37
      %s182 = sor.u32 %s180, %s181
      %p183 = scmp.eq.s32.totalorder %s182, 0
      %s185 = sadd.s32 %s184, 1
      %s186 = scalar_select %p183, %s184, %s185
      %p189 = pneg %p183
      %p190 = scmp.eq.s32.totalorder %s22, 1
      %p191 = por %p189, %p190
      %p192 = scmp.ne.s32.totalorder %s184, %s187
      %p193 = scmp.eq.s32.totalorder %s22, 0
      %p194 = por %p192, %p193
      %p195 = scmp.ne.s32.totalorder %s184, %s187
      %p196 = scmp.eq.s32.totalorder %s27, 1
      %p197 = por %p195, %p196
      %p198 = scmp.ne.s32.totalorder %s187, %s188
      %p199 = scmp.eq.s32.totalorder %s27, 0
      %p200 = por %p198, %p199
      %p201 = scmp.ne.s32.totalorder %s187, %s188
      %p202 = scmp.eq.s32.totalorder %s28, 1
      %p203 = por %p201, %p202
      %p205 = scmp.ne.s32.totalorder %s188, %s204
      %p206 = scmp.eq.s32.totalorder %s28, 0
      %p207 = por %p205, %p206
      %p208 = scmp.le.s32.totalorder 1, %s22
      %p209 = scmp.lt.s32.totalorder %s22, 3
      %p210 = pnand %p208, %p209
      %p211 = pneg %p210
      // Predicated region
      $region9: #{tpu_custom_call.1} parent=5 // pred_check
        _
      $region10: #{tpu_custom_call.1} parent=5 // pred_check_branch
        %213 = sbr.rel (%p210) target = $region12
      $region11: #{tpu_custom_call.1} parent=5 // pred_region
        %s214 = ssub.s32 %s22, 1
        // Predicated region
        $region13: #{tpu_custom_call.1} parent=11 // pred_check
          %p215 = pneg %p109
        $region14: #{tpu_custom_call.1} parent=11 // pred_check_branch
          %217 = sbr.rel (%p215) target = $region16
        $region15: #{tpu_custom_call.1} parent=11 // pred_region
          %s219 = ssub.s32 384, 384
          %220 = vsyncadd [#allocation7], %s219
          %s221 = sshll.u32 [#allocation8], 4
          %s222 = int_to_ptr.vmem [resolvable:$true] %s221
          %227 = dma.hbm_to_vmem [thread:$0]  %s2, 384, %s222, [#allocation7], 64, 64, 4
        $region16: #{tpu_custom_call.1} parent=11 // pred_fallthru
          _
        // Predicated region
        $region17: #{tpu_custom_call.1} parent=11 // pred_check
          %p228 = pneg %p130
        $region18: #{tpu_custom_call.1} parent=11 // pred_check_branch
          %230 = sbr.rel (%p228) target = $region20
        $region19: #{tpu_custom_call.1} parent=11 // pred_region
          _
        $region20: #{tpu_custom_call.1} parent=11 // pred_fallthru
          _
        // Predicated region
        $region21: #{tpu_custom_call.1} parent=11 // pred_check
          %p231 = pneg %p151
        $region22: #{tpu_custom_call.1} parent=11 // pred_check_branch
          %233 = sbr.rel (%p231) target = $region24
        $region23: #{tpu_custom_call.1} parent=11 // pred_region
          %s235 = ssub.s32 128, 128
          %236 = vsyncadd [#allocation10], %s235
          %s237 = sshll.u32 [#allocation9], 4
          %s238 = int_to_ptr.vmem [resolvable:$true] %s237
          %243 = dma.hbm_to_vmem [thread:$0]  %s4, 128, %s238, [#allocation10], 64, 64, 4
        $region24: #{tpu_custom_call.1} parent=11 // pred_fallthru
          _
        // Predicated region
        $region25: #{tpu_custom_call.1} parent=11 // pred_check
          %p244 = pneg %p172
        $region26: #{tpu_custom_call.1} parent=11 // pred_check_branch
          %246 = sbr.rel (%p244) target = $region28
        $region27: #{tpu_custom_call.1} parent=11 // pred_region
          _
        $region28: #{tpu_custom_call.1} parent=11 // pred_fallthru
          _
      $region12: #{tpu_custom_call.1} parent=5 // pred_fallthru
        _
      %p247 = scmp.lt.s32.totalorder %s22, 2
      // Predicated region
      $region29: #{tpu_custom_call.1} parent=5 // pred_check
        %p248 = pneg %p247
      $region30: #{tpu_custom_call.1} parent=5 // pred_check_branch
        %250 = sbr.rel (%p248) target = $region32
      $region31: #{tpu_custom_call.1} parent=5 // pred_region
        // Predicated region
        $region33: #{tpu_custom_call.1} parent=31 // pred_check
          %p251 = pneg %p54
        $region34: #{tpu_custom_call.1} parent=31 // pred_check_branch
          %253 = sbr.rel (%p251) target = $region36
        $region35: #{tpu_custom_call.1} parent=31 // pred_region
          %s254 = sand.u32 %s44, 1
          %s255 = scalar_lea.sflag [#allocation4], %s254
          %s256 = sand.u32 %s44, 1
          %s257 = smul.addr %s256, 4
          %s258 = scalar_lea.vmem [#allocation3], %s257
          %s260 = ssub.s32 64, 64
          %261 = vsyncadd %s255, %s260
          %s262 = smul.addr %s29, 64
          %s263 = scalar_lea.hbm %s0, %s262
          %s265 = sshll.u32 %s258, 4
          %s266 = int_to_ptr.vmem [resolvable:$true] %s265
          %268 = dma.hbm_to_vmem [thread:$0]  %s263, 64, %s266, %s255
        $region36: #{tpu_custom_call.1} parent=31 // pred_fallthru
          _
        // Predicated region
        $region37: #{tpu_custom_call.1} parent=31 // pred_check
          %p269 = pneg %p82
        $region38: #{tpu_custom_call.1} parent=31 // pred_check_branch
          %271 = sbr.rel (%p269) target = $region40
        $region39: #{tpu_custom_call.1} parent=31 // pred_region
          %s272 = sand.u32 %s22, 1
          %s273 = scalar_lea.sflag [#allocation7], %s272
          %s274 = sand.u32 %s72, 1
          %s275 = smul.addr %s274, 4
          %s276 = scalar_lea.vmem [#allocation6], %s275
          %s278 = ssub.s32 64, 64
          %279 = vsyncadd %s273, %s278
          %s280 = sadd.s32 %s30, %s29
          %s281 = smul.addr %s280, 64
          %s282 = scalar_lea.hbm %s1, %s281
          %s284 = sshll.u32 %s276, 4
          %s285 = int_to_ptr.vmem [resolvable:$true] %s284
          %287 = dma.hbm_to_vmem [thread:$0]  %s282, 64, %s285, %s273
        $region40: #{tpu_custom_call.1} parent=31 // pred_fallthru
          _
      $region32: #{tpu_custom_call.1} parent=5 // pred_fallthru
        _
      %p288 = scmp.le.s32.totalorder 1, %s22
      %p289 = scmp.lt.s32.totalorder %s22, 3
      %p290 = pnand %p288, %p289
      %p291 = pneg %p290
      // Predicated region
      $region41: #{tpu_custom_call.1} parent=5 // pred_check
        _
      $region42: #{tpu_custom_call.1} parent=5 // pred_check_branch
        %293 = sbr.rel (%p290) target = $region44
      $region43: #{tpu_custom_call.1} parent=5 // pred_region
        %s294 = ssub.s32 %s22, 1
        %s295 = sand.u32 %s47, 1
        %s296 = scalar_lea.sflag [#allocation4], %s295
        %s297 = sand.u32 %s47, 1
        %s298 = smul.addr %s297, 4
        %s299 = scalar_lea.vmem [#allocation3], %s298
        // Predicated region
        $region45: #{tpu_custom_call.1} parent=43 // pred_check
          %p300 = pneg %p60
        $region46: #{tpu_custom_call.1} parent=43 // pred_check_branch
          %302 = sbr.rel (%p300) target = $region48
        $region47: #{tpu_custom_call.1} parent=43 // pred_region
          %303 = dma.done %s296, 64
        $region48: #{tpu_custom_call.1} parent=43 // pred_fallthru
          _
        %s304 = sand.u32 %s27, 1
        %s305 = scalar_lea.sflag [#allocation7], %s304
        %s306 = sand.u32 %s75, 1
        %s307 = smul.addr %s306, 4
        %s308 = scalar_lea.vmem [#allocation6], %s307
        // Predicated region
        $region49: #{tpu_custom_call.1} parent=43 // pred_check
          %p309 = pneg %p88
        $region50: #{tpu_custom_call.1} parent=43 // pred_check_branch
          %311 = sbr.rel (%p309) target = $region52
        $region51: #{tpu_custom_call.1} parent=43 // pred_region
          %312 = dma.done %s305, 64
        $region52: #{tpu_custom_call.1} parent=43 // pred_fallthru
          _
        // Predicated region
        $region53: #{tpu_custom_call.1} parent=43 // pred_check
          %p313 = pneg %p109
        $region54: #{tpu_custom_call.1} parent=43 // pred_check_branch
          %315 = sbr.rel (%p313) target = $region56
        $region55: #{tpu_custom_call.1} parent=43 // pred_region
          %316 = dma.done [#allocation7], 384
        $region56: #{tpu_custom_call.1} parent=43 // pred_fallthru
          _
        // Predicated region
        $region57: #{tpu_custom_call.1} parent=43 // pred_check
          %p317 = pneg %p151
        $region58: #{tpu_custom_call.1} parent=43 // pred_check_branch
          %319 = sbr.rel (%p317) target = $region60
        $region59: #{tpu_custom_call.1} parent=43 // pred_region
          %320 = dma.done [#allocation10], 128
        $region60: #{tpu_custom_call.1} parent=43 // pred_fallthru
          _
        %s321 = sand.u32 %s47, 1
        %s322 = scalar_lea.sflag [#allocation4], %s321
        %s323 = sand.u32 %s47, 1
        %s324 = smul.addr %s323, 4
        %s325 = scalar_lea.vmem [#allocation3], %s324
        %p326 = pneg %p60
        %p327 = pneg %p57
        %s328 = sand.u32 %s27, 1
        %s329 = scalar_lea.sflag [#allocation7], %s328
        %s330 = sand.u32 %s75, 1
        %s331 = smul.addr %s330, 4
        %s332 = scalar_lea.vmem [#allocation6], %s331
        %p333 = pneg %p88
        %p334 = pneg %p85
        %p335 = pneg %p109
        %p336 = pneg %p106
        %p337 = pneg %p130
        %p338 = pneg %p127
        %p339 = pneg %p151
        %p340 = pneg %p148
        %p341 = pneg %p172
        %p342 = pneg %p169
        %p343 = pneg %p200
        %p344 = pneg %p197
        %s345 = sand.u32 %s187, 1
        %s346 = scalar_lea.sflag [#allocation5], %s345
        %s347 = sand.u32 %s187, 1
        %s348 = smul.addr %s347, 8
        %s349 = scalar_lea.vmem [#allocation11], %s348
        %p351 = scmp.eq.s32.totalorder %s32, 0
        // Predicated region
        $region61: #{tpu_custom_call.1} parent=43 // pred_check
          %p352 = pneg %p351
        $region62: #{tpu_custom_call.1} parent=43 // pred_check_branch
          %354 = sbr.rel (%p352) target = $region64
        $region63: #{tpu_custom_call.1} parent=43 // pred_region
          %v355 = vld [vmem:[%s299] sm:$0xf]
          %v356 = vld [vmem:[#allocation8] sm:$0xf]
          %v357 = vld [vmem:[#allocation8 + $0x4] sm:$0xf]
          %v358 = vld [vmem:[%s3] sm:$0x1]
          %v360 = vlaneseq
          %v361 = vshrl.u32 %v360, 7
          %v362 = vsub.s32 0, %v361
          %v363 = vrot.slane %v358, %v362
          %v367 = vunpack.c.l.b16 %v356
          %v368 = vunpack.c.l.b16 %v357
          %v369 = vpack.c.b16 %v368, %v367
          %vm371 = vcmask 130048
          %v373 = vsel %vm371, %v355, 0
          %375 = vmatprep.subr.bf16.mxu0 0
          %376 = vmatpush1.bf16.msra.mxu0 0
          %377 = vmatprep.subr.bf16.mxu0 0
          %378 = vmatpush1.bf16.msra.mxu0 0
          %379 = vmatprep.subr.bf16.mxu0 0
          %380 = vmatpush1.bf16.msra.mxu0 0
          %381 = vmatprep.subr.bf16.mxu0 0
          %382 = vmatpush1.bf16.msra.mxu0 0
          %383 = vmatprep.subr.bf16.mxu0 0
          %384 = vmatpush1.bf16.msra.mxu0 0
          %385 = vmatprep.subr.bf16.mxu0 0
          %386 = vmatpush1.bf16.msra.mxu0 0
          %387 = vmatprep.subr.bf16.mxu0 0
          %388 = vmatpush1.bf16.msra.mxu0 0
          %389 = vmatprep.subr.bf16.mxu0 0
          %390 = vmatpush1.bf16.msra.mxu0 %v369
          %391 = vmatprep.subr.bf16.mxu0 0
          %392 = vmatpush2.bf16.msra.mxu0 0
          %393 = vmatprep.subr.bf16.mxu0 0
          %394 = vmatpush2.bf16.msra.mxu0 0
          %395 = vmatprep.subr.bf16.mxu0 0
          %396 = vmatpush2.bf16.msra.mxu0 0
          %397 = vmatprep.subr.bf16.mxu0 0
          %398 = vmatpush2.bf16.msra.mxu0 0
          %399 = vmatprep.subr.bf16.mxu0 0
          %400 = vmatpush2.bf16.msra.mxu0 0
          %401 = vmatprep.subr.bf16.mxu0 0
          %402 = vmatpush2.bf16.msra.mxu0 0
          %403 = vmatprep.subr.bf16.mxu0 0
          %404 = vmatpush2.bf16.msra.mxu0 0
          %405 = vmatprep.subr.bf16.mxu0 0
          %406 = vmatpush2.bf16.msra.mxu0 0
          %407 = vmatprep.mubr.bf16.mxu0 0
          %408 = vmatmul.mubr.bf16.gmra.mxu0 %v373
          %v409 = vpop.f32.mrf.mxu0
          %v410 = vadd.f32 %v363, %v409
          %v411 = vpop.f32.mrf.mxu0
          %v412 = vpop.f32.mrf.mxu0
          %v413 = vpop.f32.mrf.mxu0
          %414 = vdwg.mxu0
          %v415 = vpack.c.bf16 %v410, %v410
          %416 = vst [vmem:[#allocation2] sm:$0xf] %v415
          %s417 = scalar_lea.vmem [#allocation8], 8
          %v418 = vld [vmem:[%s417] sm:$0xf]
          %v419 = vld [vmem:[%s417 + $0x4] sm:$0xf]
          %s420 = scalar_lea.vmem %s3, 1
          %v421 = vld [vmem:[%s420] sm:$0x1]
          %v423 = vlaneseq
          %v424 = vshrl.u32 %v423, 7
          %v425 = vsub.s32 0, %v424
          %v426 = vrot.slane %v421, %v425
          %v430 = vunpack.c.l.b16 %v418
          %v431 = vunpack.c.l.b16 %v419
          %v432 = vpack.c.b16 %v431, %v430
          %434 = vmatprep.subr.bf16.mxu0 0
          %435 = vmatpush1.bf16.msra.mxu0 0
          %436 = vmatprep.subr.bf16.mxu0 0
          %437 = vmatpush1.bf16.msra.mxu0 0
          %438 = vmatprep.subr.bf16.mxu0 0
          %439 = vmatpush1.bf16.msra.mxu0 0
          %440 = vmatprep.subr.bf16.mxu0 0
          %441 = vmatpush1.bf16.msra.mxu0 0
          %442 = vmatprep.subr.bf16.mxu0 0
          %443 = vmatpush1.bf16.msra.mxu0 0
          %444 = vmatprep.subr.bf16.mxu0 0
          %445 = vmatpush1.bf16.msra.mxu0 0
          %446 = vmatprep.subr.bf16.mxu0 0
          %447 = vmatpush1.bf16.msra.mxu0 0
          %448 = vmatprep.subr.bf16.mxu0 0
          %449 = vmatpush1.bf16.msra.mxu0 %v432
          %450 = vmatprep.subr.bf16.mxu0 0
          %451 = vmatpush2.bf16.msra.mxu0 0
          %452 = vmatprep.subr.bf16.mxu0 0
          %453 = vmatpush2.bf16.msra.mxu0 0
          %454 = vmatprep.subr.bf16.mxu0 0
          %455 = vmatpush2.bf16.msra.mxu0 0
          %456 = vmatprep.subr.bf16.mxu0 0
          %457 = vmatpush2.bf16.msra.mxu0 0
          %458 = vmatprep.subr.bf16.mxu0 0
          %459 = vmatpush2.bf16.msra.mxu0 0
          %460 = vmatprep.subr.bf16.mxu0 0
          %461 = vmatpush2.bf16.msra.mxu0 0
          %462 = vmatprep.subr.bf16.mxu0 0
          %463 = vmatpush2.bf16.msra.mxu0 0
          %464 = vmatprep.subr.bf16.mxu0 0
          %465 = vmatpush2.bf16.msra.mxu0 0
          %466 = vmatprep.mubr.bf16.mxu0 0
          %467 = vmatmul.mubr.bf16.gmra.mxu0 %v373
          %v468 = vpop.f32.mrf.mxu0
          %v469 = vadd.f32 %v426, %v468
          %v470 = vpop.f32.mrf.mxu0
          %v471 = vpop.f32.mrf.mxu0
          %v472 = vpop.f32.mrf.mxu0
          %473 = vdwg.mxu0
          %v474 = vpack.c.bf16 %v469, %v469
          %475 = vst [vmem:[#allocation2 + $0x4] sm:$0xf] %v474
          %s476 = scalar_lea.vmem [#allocation8], 16
          %v477 = vld [vmem:[%s476] sm:$0xf]
          %v478 = vld [vmem:[%s476 + $0x4] sm:$0xf]
          %s479 = scalar_lea.vmem %s3, 2
          %v480 = vld [vmem:[%s479] sm:$0x1]
          %v482 = vlaneseq
          %v483 = vshrl.u32 %v482, 7
          %v484 = vsub.s32 0, %v483
          %v485 = vrot.slane %v480, %v484
          %v489 = vunpack.c.l.b16 %v477
          %v490 = vunpack.c.l.b16 %v478
          %v491 = vpack.c.b16 %v490, %v489
          %493 = vmatprep.subr.bf16.mxu0 0
          %494 = vmatpush1.bf16.msra.mxu0 0
          %495 = vmatprep.subr.bf16.mxu0 0
          %496 = vmatpush1.bf16.msra.mxu0 0
          %497 = vmatprep.subr.bf16.mxu0 0
          %498 = vmatpush1.bf16.msra.mxu0 0
          %499 = vmatprep.subr.bf16.mxu0 0
          %500 = vmatpush1.bf16.msra.mxu0 0
          %501 = vmatprep.subr.bf16.mxu0 0
          %502 = vmatpush1.bf16.msra.mxu0 0
          %503 = vmatprep.subr.bf16.mxu0 0
          %504 = vmatpush1.bf16.msra.mxu0 0
          %505 = vmatprep.subr.bf16.mxu0 0
          %506 = vmatpush1.bf16.msra.mxu0 0
          %507 = vmatprep.subr.bf16.mxu0 0
          %508 = vmatpush1.bf16.msra.mxu0 %v491
          %509 = vmatprep.subr.bf16.mxu0 0
          %510 = vmatpush2.bf16.msra.mxu0 0
          %511 = vmatprep.subr.bf16.mxu0 0
          %512 = vmatpush2.bf16.msra.mxu0 0
          %513 = vmatprep.subr.bf16.mxu0 0
          %514 = vmatpush2.bf16.msra.mxu0 0
          %515 = vmatprep.subr.bf16.mxu0 0
          %516 = vmatpush2.bf16.msra.mxu0 0
          %517 = vmatprep.subr.bf16.mxu0 0
          %518 = vmatpush2.bf16.msra.mxu0 0
          %519 = vmatprep.subr.bf16.mxu0 0
          %520 = vmatpush2.bf16.msra.mxu0 0
          %521 = vmatprep.subr.bf16.mxu0 0
          %522 = vmatpush2.bf16.msra.mxu0 0
          %523 = vmatprep.subr.bf16.mxu0 0
          %524 = vmatpush2.bf16.msra.mxu0 0
          %525 = vmatprep.mubr.bf16.mxu0 0
          %526 = vmatmul.mubr.bf16.gmra.mxu0 %v373
          %v527 = vpop.f32.mrf.mxu0
          %v528 = vadd.f32 %v485, %v527
          %v529 = vpop.f32.mrf.mxu0
          %v530 = vpop.f32.mrf.mxu0
          %v531 = vpop.f32.mrf.mxu0
          %532 = vdwg.mxu0
          %v533 = vpack.c.bf16 %v528, %v528
          %534 = vst [vmem:[#allocation2 + $0x8] sm:$0xf] %v533
        $region64: #{tpu_custom_call.1} parent=43 // pred_fallthru
          _
        %v535 = vld [vmem:[%s308] sm:$0xf]
        %v536 = vld [vmem:[#allocation2] sm:$0xf]
        %v537 = vld [vmem:[#allocation2 + $0x4] sm:$0xf]
        %v538 = vld [vmem:[#allocation2 + $0x8] sm:$0xf]
        %s539 = smul.u32 %s32, 8
        %s540 = sshra.s32 %s539, 3
        %s541 = sand.u32 %s539, 7
        %s542 = smul.addr %s540, 4
        %s543 = scalar_lea.vmem %s299, %s542 [#allocation3]
        %v544 = vld [vmem:[%s543] sm:$0xf]
        %v545 = vld [vmem:[#allocation9] sm:$0xf]
        %v546 = vld [vmem:[#allocation9 + $0x4] sm:$0xf]
        %v547 = vld [vmem:[%s5] sm:$0x1]
        %v549 = vlaneseq
        %v550 = vshrl.u32 %v549, 7
        %v551 = vsub.s32 0, %v550
        %v552 = vrot.slane %v547, %v551
        %v556 = vunpack.c.l.b16 %v545
        %v557 = vunpack.c.l.b16 %v546
        %v558 = vpack.c.b16 %v557, %v556
        %vm560 = vcmask 130048
        %v562 = vsel %vm560, %v544, 0
        %564 = vmatprep.subr.bf16.mxu0 0
        %565 = vmatpush1.bf16.msra.mxu0 0
        %566 = vmatprep.subr.bf16.mxu0 0
        %567 = vmatpush1.bf16.msra.mxu0 0
        %568 = vmatprep.subr.bf16.mxu0 0
        %569 = vmatpush1.bf16.msra.mxu0 0
        %570 = vmatprep.subr.bf16.mxu0 0
        %571 = vmatpush1.bf16.msra.mxu0 0
        %572 = vmatprep.subr.bf16.mxu0 0
        %573 = vmatpush1.bf16.msra.mxu0 0
        %574 = vmatprep.subr.bf16.mxu0 0
        %575 = vmatpush1.bf16.msra.mxu0 0
        %576 = vmatprep.subr.bf16.mxu0 0
        %577 = vmatpush1.bf16.msra.mxu0 0
        %578 = vmatprep.subr.bf16.mxu0 0
        %579 = vmatpush1.bf16.msra.mxu0 %v558
        %580 = vmatprep.subr.bf16.mxu0 0
        %581 = vmatpush2.bf16.msra.mxu0 0
        %582 = vmatprep.subr.bf16.mxu0 0
        %583 = vmatpush2.bf16.msra.mxu0 0
        %584 = vmatprep.subr.bf16.mxu0 0
        %585 = vmatpush2.bf16.msra.mxu0 0
        %586 = vmatprep.subr.bf16.mxu0 0
        %587 = vmatpush2.bf16.msra.mxu0 0
        %588 = vmatprep.subr.bf16.mxu0 0
        %589 = vmatpush2.bf16.msra.mxu0 0
        %590 = vmatprep.subr.bf16.mxu0 0
        %591 = vmatpush2.bf16.msra.mxu0 0
        %592 = vmatprep.subr.bf16.mxu0 0
        %593 = vmatpush2.bf16.msra.mxu0 0
        %594 = vmatprep.subr.bf16.mxu0 0
        %595 = vmatpush2.bf16.msra.mxu0 0
        %596 = vmatprep.mubr.bf16.mxu0 0
        %597 = vmatmul.mubr.bf16.gmra.mxu0 %v562
        %v598 = vpop.f32.mrf.mxu0
        %v599 = vadd.f32 %v552, %v598
        %v600 = vpop.f32.mrf.mxu0
        %v601 = vpop.f32.mrf.mxu0
        %v602 = vpop.f32.mrf.mxu0
        %603 = vdwg.mxu0
        %v607 = vunpack.c.l.b16 %v536
        %v608 = vunpack.c.l.b16 %v537
        %v609 = vunpack.c.l.b16 %v538
        %v610 = vpack.c.b16 %v608, %v607
        %v611 = vpack.c.b16 %v609, %v609
        %vm613 = vcmask 195584
        %v615 = vsel %vm613, %v535, 0
        %vm617 = vcmask 1043456
        %v619 = vsel %vm617, %v611, 0
        %621 = vmatprep.subr.bf16.mxu0 0
        %622 = vmatpush1.bf16.msra.mxu0 0
        %623 = vmatprep.subr.bf16.mxu0 0
        %624 = vmatpush1.bf16.msra.mxu0 0
        %625 = vmatprep.subr.bf16.mxu0 0
        %626 = vmatpush1.bf16.msra.mxu0 0
        %627 = vmatprep.subr.bf16.mxu0 0
        %628 = vmatpush1.bf16.msra.mxu0 0
        %629 = vmatprep.subr.bf16.mxu0 0
        %630 = vmatpush1.bf16.msra.mxu0 0
        %631 = vmatprep.subr.bf16.mxu0 0
        %632 = vmatpush1.bf16.msra.mxu0 0
        %633 = vmatprep.subr.bf16.mxu0 0
        %634 = vmatpush1.bf16.msra.mxu0 %v619
        %635 = vmatprep.subr.bf16.mxu0 0
        %636 = vmatpush1.bf16.msra.mxu0 %v610
        %637 = vmatprep.subr.bf16.mxu0 0
        %638 = vmatpush2.bf16.msra.mxu0 0
        %639 = vmatprep.subr.bf16.mxu0 0
        %640 = vmatpush2.bf16.msra.mxu0 0
        %641 = vmatprep.subr.bf16.mxu0 0
        %642 = vmatpush2.bf16.msra.mxu0 0
        %643 = vmatprep.subr.bf16.mxu0 0
        %644 = vmatpush2.bf16.msra.mxu0 0
        %645 = vmatprep.subr.bf16.mxu0 0
        %646 = vmatpush2.bf16.msra.mxu0 0
        %647 = vmatprep.subr.bf16.mxu0 0
        %648 = vmatpush2.bf16.msra.mxu0 0
        %649 = vmatprep.subr.bf16.mxu0 0
        %650 = vmatpush2.bf16.msra.mxu0 0
        %651 = vmatprep.subr.bf16.mxu0 0
        %652 = vmatpush2.bf16.msra.mxu0 0
        %653 = vmatprep.mubr.bf16.mxu0 0
        %654 = vmatmul.mubr.bf16.gmra.mxu0 %v615
        %v655 = vpop.f32.mrf.mxu0
        %v656 = vadd.f32 %v599, %v655
        %v657 = vpop.f32.mrf.mxu0
        %v658 = vpop.f32.mrf.mxu0
        %v659 = vpop.f32.mrf.mxu0
        %660 = vdwg.mxu0
        %v661 = vtanh.pop %v656
        %662 = vst [vmem:[%s349] sm:$0xff] %v661
        %s663 = sand.u32 %s187, 1
        %s664 = scalar_lea.sflag [#allocation5], %s663
        %s665 = sand.u32 %s187, 1
        %s666 = smul.addr %s665, 8
        %s667 = scalar_lea.vmem [#allocation11], %s666
        // Predicated region
        $region65: #{tpu_custom_call.1} parent=43 // pred_check
          %p668 = pneg %p197
        $region66: #{tpu_custom_call.1} parent=43 // pred_check_branch
          %670 = sbr.rel (%p668) target = $region68
        $region67: #{tpu_custom_call.1} parent=43 // pred_region
          %s672 = ssub.s32 128, 128
          %673 = vsyncadd %s664, %s672
          %s674 = sadd.s32 %s32, %s31
          %s675 = smul.addr %s674, 128
          %s676 = scalar_lea.hbm %s6, %s675
          %s678 = sshll.u32 %s667, 4
          %s679 = int_to_ptr.vmem [resolvable:$true] %s678
          %681 = dma.vmem_to_hbm [thread:$0]  %s679, 128, %s676, %s664
        $region68: #{tpu_custom_call.1} parent=43 // pred_fallthru
          _
      $region44: #{tpu_custom_call.1} parent=5 // pred_fallthru
        _
      %p682 = scmp.le.s32.totalorder 2, %s22
      // Predicated region
      $region69: #{tpu_custom_call.1} parent=5 // pred_check
        %p683 = pneg %p682
      $region70: #{tpu_custom_call.1} parent=5 // pred_check_branch
        %685 = sbr.rel (%p683) target = $region72
      $region71: #{tpu_custom_call.1} parent=5 // pred_region
        %s686 = ssub.s32 %s22, 2
        // Predicated region
        $region73: #{tpu_custom_call.1} parent=71 // pred_check
          %p687 = pneg %p203
        $region74: #{tpu_custom_call.1} parent=71 // pred_check_branch
          %689 = sbr.rel (%p687) target = $region76
        $region75: #{tpu_custom_call.1} parent=71 // pred_region
          %s690 = sand.u32 %s188, 1
          %s691 = scalar_lea.sflag [#allocation5], %s690
          %s692 = sand.u32 %s188, 1
          %s693 = smul.addr %s692, 8
          %s694 = scalar_lea.vmem [#allocation11], %s693
          %695 = dma.done %s691, 128
        $region76: #{tpu_custom_call.1} parent=71 // pred_fallthru
          _
      $region72: #{tpu_custom_call.1} parent=5 // pred_fallthru
        _
    $region6: #{tpu_custom_call.1} parent=1 // loop_footer
      %s26 = sadd.s32 1, %s22
    $region7: #{tpu_custom_call.1} parent=1 // loop_footer_branch
      %21 = sbr.rel target = $region3
    $region8: #{tpu_custom_call.1} parent=1 // loop_exit
      _
    %696 = vsyncpa [#allocation4], 1
    %s697 = scalar_lea.sflag [#allocation4], 1
    %698 = vsyncpa %s697, 1
    %699 = vsyncpa [#allocation7], 1
    %s700 = scalar_lea.sflag [#allocation7], 1
    %701 = vsyncpa %s700, 1
    %702 = vsyncpa [#allocation10], 1
    %703 = vsyncpa [#allocation5], 1
    %s704 = scalar_lea.sflag [#allocation5], 1
    %705 = vsyncpa %s704, 1

</llo_original>
